<compile_context>
chip_gen: v5e
topology: v5e:2x2
jax: 0.10.0
libtpu: 0.0.40
codegen_flags: <defaults>
</compile_context>

<pallas_src>
import functools

import jax
import jax.numpy as jnp
import numpy as np
from jax.experimental import pallas as pl
from jax.experimental.pallas import tpu as pltpu

EPS = 1e-5          # torch.nn.InstanceNorm2d default
NEG_SLOPE = 0.01    # LeakyReLU default in BasicConv_IN

# conv1 (3x3, stride 2, pad 1) taps, grouped by whether they read the missing left
# column (dj == 0 -> needs mask_l) or not.
_GROUP_A = ((0, 0), (1, 0), (2, 0))
_GROUP_B = ((0, 1), (0, 2), (1, 1), (1, 2), (2, 1), (2, 2))


def _vmem_limit_bytes():
    """75% of physical VMEM (works on v5e/v6e 128 MiB and v7x 64 MiB)."""
    try:
        cap = int(pltpu.get_tpu_info().vmem_capacity_bytes)
    except Exception:
        cap = 64 * 1024 * 1024
    return (cap // 4) * 3


def _compiler_params():
    return pltpu.CompilerParams(
        dimension_semantics=("parallel",),
        vmem_limit_bytes=_vmem_limit_bytes(),
    )


def _pick_batch_tile(n):
    """Batch samples per grid step; keep >= 2 grid steps so v7x megacore has work."""
    if n <= 2:
        return 1
    for bt in (8, 4, 2):
        if n % bt == 0 and n // bt >= 2:
            return bt
    return 1


# ----------------------------------------------------------------------------
# In-kernel building blocks
# ----------------------------------------------------------------------------
def _in_lrelu(y):
    """InstanceNorm (no affine, biased var, eps=1e-5) + LeakyReLU over the lane axis.

    y: (C, P) float32.  Two-pass (shifted) variance to avoid E[x^2]-E[x]^2 cancellation.
    """
    inv_p = 1.0 / y.shape[-1]
    mean = jnp.sum(y, axis=-1, keepdims=True) * inv_p
    d = y - mean
    var = jnp.sum(d * d, axis=-1, keepdims=True) * inv_p
    y = d * jax.lax.rsqrt(var + EPS)
    return jnp.maximum(y, NEG_SLOPE * y)


def _conv1_tap_info(di, dj, W2):
    """Space-to-depth plane id and start offset inside zbuf1 for stride-2 tap (di, dj)."""
    rp = 0 if di == 1 else 1          # row parity of the needed input row
    cp = 0 if dj == 1 else 1          # col parity of the needed input col
    plane = rp * 2 + cp
    start = (1 + W2) + (-W2 if di == 0 else 0) + (-1 if dj == 0 else 0)
    return plane, start


def _conv1_slab(zbuf1_ref, taps, Cin, W2, P):
    """Stack the given conv1 taps along the contraction axis -> (len(taps)*Cin, P)."""
    parts = []
    for (di, dj) in taps:
        plane, start = _conv1_tap_info(di, dj, W2)
        parts.append(zbuf1_ref[plane * Cin:(plane + 1) * Cin, start:start + P])
    return jnp.concatenate(parts, axis=0)


def _conv2_from_zbuf(zbuf2_ref, w2g_ref, mask_l, mask_r, *, H2, W2):
    """3x3 / stride-1 / pad-1 conv over the H-padded row-flattened scratch + IN + LReLU.

    zbuf2_ref: (Cmid, (H2+2)*W2 + 2) bf16 scratch (pads already zero, interior fresh).
    w2g_ref:   (3, C2, 3*Cmid) bf16, one (C2, 3*Cmid) weight slab per kernel column dj.
    Returns (C2, H2*W2) f32.
    """
    P = H2 * W2

    def slab(dj):  # (3*Cmid, P): the three row taps for kernel column dj
        return jnp.concatenate(
            [zbuf2_ref[:, di * W2 + dj: di * W2 + dj + P] for di in range(3)], axis=0)

    # One wide-K matmul per dj group; edge masks applied once, post-matmul, in f32.
    acc = jnp.dot(w2g_ref[1], slab(1), preferred_element_type=jnp.float32)
    acc = acc + jnp.dot(w2g_ref[0], slab(0), preferred_element_type=jnp.float32) * mask_l
    acc = acc + jnp.dot(w2g_ref[2], slab(2), preferred_element_type=jnp.float32) * mask_r
    return _in_lrelu(acc)


def _zero_zbuf2_pads(zbuf2_ref, W2, P):
    cmid = zbuf2_ref.shape[0]
    zeros = jnp.zeros((cmid, W2 + 1), zbuf2_ref.dtype)
    zbuf2_ref[:, 0:W2 + 1] = zeros            # leading element + top pad row
    zbuf2_ref[:, 1 + W2 + P:] = zeros         # bottom pad row + trailing element


# ----------------------------------------------------------------------------
# Kernels
# ----------------------------------------------------------------------------
def _fused_kernel(planes_ref, rem_ref, mask_ref, w1a_ref, w1b_ref, w2g_ref,
                  o_ref, zbuf1_ref, zbuf2_ref, *, H2, W2, Cin, C1):
    """conv1(+IN+LReLU) -> concat(rem) -> conv2(+IN+LReLU), all in VMEM.

    planes_ref: (B, 4*Cin, P) bf16 space-to-depth planes of x (plane = row/col parity).
    rem_ref:    (B, C1, P)  bf16.
    mask_ref:   (2, P) f32  -- row 0 zeroes w==0 columns, row 1 zeroes w==W2-1 columns.
    """
    P = H2 * W2
    B = planes_ref.shape[0]
    Cmid = zbuf2_ref.shape[0]
    mask_l = mask_ref[0:1, :]
    mask_r = mask_ref[1:2, :]

    # Zero only the pad lanes (interiors are fully overwritten every sample).
    zbuf1_ref[:, 0:W2 + 1] = jnp.zeros((zbuf1_ref.shape[0], W2 + 1), zbuf1_ref.dtype)
    _zero_zbuf2_pads(zbuf2_ref, W2, P)

    for b in range(B):                                   # static unroll over batch tile
        # ---- conv1 (stride 2) from space-to-depth planes -----------------------------
        zbuf1_ref[:, 1 + W2:] = planes_ref[b]
        slab_a = _conv1_slab(zbuf1_ref, _GROUP_A, Cin, W2, P)   # (3*Cin, P)
        slab_b = _conv1_slab(zbuf1_ref, _GROUP_B, Cin, W2, P)   # (6*Cin, P)
        y = (jnp.dot(w1a_ref[...], slab_a, preferred_element_type=jnp.float32) * mask_l
             + jnp.dot(w1b_ref[...], slab_b, preferred_element_type=jnp.float32))
        y = _in_lrelu(y)                                         # (C1, P) f32

        # ---- channel concat [y, rem] straight into the conv2 scratch -----------------
        zbuf2_ref[0:C1, 1 + W2:1 + W2 + P] = y.astype(zbuf2_ref.dtype)
        zbuf2_ref[C1:Cmid, 1 + W2:1 + W2 + P] = rem_ref[b]

        # ---- conv2 + IN + LReLU -------------------------------------------------------
        o_ref[b] = _conv2_from_zbuf(zbuf2_ref, w2g_ref, mask_l, mask_r,
                                    H2=H2, W2=W2).astype(o_ref.dtype)


def _conv1_kernel(p_ref, w_ref, o_ref):
    """Standalone conv1 + IN + LeakyReLU (rare path: odd spatial sizes, uses im2col)."""
    for b in range(p_ref.shape[0]):
        o_ref[b] = _in_lrelu(
            jnp.dot(w_ref[...], p_ref[b], preferred_element_type=jnp.float32)
        ).astype(o_ref.dtype)


def _concat_conv2_kernel(y_ref, rem_ref, mask_ref, w2g_ref, o_ref, zbuf2_ref, *, H2, W2):
    """conv2 + IN + LeakyReLU; y and rem are concatenated in-kernel (no XLA concat)."""
    P = H2 * W2
    Cmid = zbuf2_ref.shape[0]
    C1 = y_ref.shape[1]
    mask_l = mask_ref[0:1, :]
    mask_r = mask_ref[1:2, :]
    _zero_zbuf2_pads(zbuf2_ref, W2, P)
    for b in range(y_ref.shape[0]):
        zbuf2_ref[0:C1, 1 + W2:1 + W2 + P] = y_ref[b]
        zbuf2_ref[C1:Cmid, 1 + W2:1 + W2 + P] = rem_ref[b]
        o_ref[b] = _conv2_from_zbuf(zbuf2_ref, w2g_ref, mask_l, mask_r,
                                    H2=H2, W2=W2).astype(o_ref.dtype)


# ----------------------------------------------------------------------------
# JAX-side glue (all NCHW, no layout transposes at the kernel boundary)
# ----------------------------------------------------------------------------
def _im2col_nchw(x, kh, kw, stride, pad):
    """x: (N, C, H, W) -> lane-dense patches (N, C*kh*kw, OH*OW), plus (OH, OW)."""
    N, C, H, W = x.shape
    xp = jnp.pad(x, ((0, 0), (0, 0), (pad, pad), (pad, pad)))
    OH = (H + 2 * pad - kh) // stride + 1
    OW = (W + 2 * pad - kw) // stride + 1
    taps = [xp[:, :, i:i + stride * OH:stride, j:j + stride * OW:stride]
            for i in range(kh) for j in range(kw)]
    p = jnp.stack(taps, axis=2)                        # (N, C, kh*kw, OH, OW)
    return p.reshape(N, C * kh * kw, OH * OW), OH, OW


def _nearest_resize_nchw(x, oh, ow):
    # matches F.interpolate(..., mode='nearest'): src = floor(dst * in / out)
    N, C, H, W = x.shape
    ri = (jnp.arange(oh) * H // oh).astype(jnp.int32)
    ci = (jnp.arange(ow) * W // ow).astype(jnp.int32)
    return x[:, :, ri][:, :, :, ci]


def conv2x_in_forward(x_nchw, rem_nchw, w1_oihw, w2_oihw, *, out_dtype=jnp.bfloat16):
    """Conv2x_IN.forward (deconv=False, is_3d=False, concat=True).  All tensors NCHW."""
    N, Cin, H, W = x_nchw.shape
    C1 = w1_oihw.shape[0]
    C2, Cmid = w2_oihw.shape[0], w2_oihw.shape[1]
    H2, W2 = rem_nchw.shape[2], rem_nchw.shape[3]
    P2 = H2 * W2
    assert rem_nchw.shape[1] == C1 and Cmid == 2 * C1

    B = _pick_batch_tile(N)
    grid = (N // B,)
    cparams = _compiler_params()

    # Edge masks for the in-kernel taps (the missing W-padding columns), f32 post-matmul.
    col = np.arange(P2) % W2
    masks = jnp.asarray(np.stack([col != 0, col != W2 - 1]).astype(np.float32))  # (2, P2)

    # conv2 weights grouped by kernel column dj: (3, C2, 3*Cmid) per-dj slabs.
    w2g = jnp.stack(
        [jnp.concatenate([w2_oihw[:, :, di, dj] for di in range(3)], axis=1)
         for dj in range(3)], axis=0).astype(jnp.bfloat16)

    rem_flat = rem_nchw.reshape(N, C1, P2).astype(jnp.bfloat16)

    mask_spec = pl.BlockSpec((2, P2), lambda n: (0, 0))
    w2_spec = pl.BlockSpec((3, C2, 3 * Cmid), lambda n: (0, 0, 0))
    out_spec = pl.BlockSpec((B, C2, P2), lambda n: (n, 0, 0))
    out_shape = jax.ShapeDtypeStruct((N, C2, P2), out_dtype)
    zbuf2_alloc = pltpu.VMEM((Cmid, (H2 + 2) * W2 + 2), jnp.bfloat16)

    fused_ok = (H % 2 == 0) and (W % 2 == 0) and (H // 2, W // 2) == (H2, W2)

    if fused_ok:
        # Space-to-depth: (N, Cin, H, W) -> (N, 4*Cin, H2*W2); one HBM pass of x.
        planes = jnp.transpose(
            x_nchw.reshape(N, Cin, H2, 2, W2, 2), (0, 3, 5, 1, 2, 4)
        ).reshape(N, 4 * Cin, P2).astype(jnp.bfloat16)

        w1a = jnp.concatenate([w1_oihw[:, :, di, dj] for (di, dj) in _GROUP_A],
                              axis=1).astype(jnp.bfloat16)          # (C1, 3*Cin)
        w1b = jnp.concatenate([w1_oihw[:, :, di, dj] for (di, dj) in _GROUP_B],
                              axis=1).astype(jnp.bfloat16)          # (C1, 6*Cin)

        out = pl.pallas_call(
            functools.partial(_fused_kernel, H2=H2, W2=W2, Cin=Cin, C1=C1),
            out_shape=out_shape,
            grid=grid,
            in_specs=[
                pl.BlockSpec((B, 4 * Cin, P2), lambda n: (n, 0, 0)),
                pl.BlockSpec((B, C1, P2), lambda n: (n, 0, 0)),
                mask_spec,
                pl.BlockSpec((C1, 3 * Cin), lambda n: (0, 0)),
                pl.BlockSpec((C1, 6 * Cin), lambda n: (0, 0)),
                w2_spec,
            ],
            out_specs=out_spec,
            scratch_shapes=[pltpu.VMEM((4 * Cin, 1 + W2 + P2), jnp.bfloat16),
                            zbuf2_alloc],
            compiler_params=cparams,
        )(planes, rem_flat, masks, w1a, w1b, w2g)
    else:
        # Rare path (odd spatial sizes): XLA im2col -> conv1 kernel (bf16 out) ->
        # nearest resize in JAX -> conv2 kernel with y / rem concatenated in-kernel.
        patches1, OH1, OW1 = _im2col_nchw(x_nchw.astype(jnp.bfloat16), 3, 3, 2, 1)
        K1, P1 = patches1.shape[1], patches1.shape[2]
        w1m = w1_oihw.reshape(C1, K1).astype(jnp.bfloat16)
        y = pl.pallas_call(
            _conv1_kernel,
            out_shape=jax.ShapeDtypeStruct((N, C1, P1), jnp.bfloat16),
            grid=grid,
            in_specs=[pl.BlockSpec((B, K1, P1), lambda n: (n, 0, 0)),
                      pl.BlockSpec((C1, K1), lambda n: (0, 0))],
            out_specs=pl.BlockSpec((B, C1, P1), lambda n: (n, 0, 0)),
            compiler_params=cparams,
        )(patches1, w1m)
        y = y.reshape(N, C1, OH1, OW1)
        if (OH1, OW1) != (H2, W2):
            y = _nearest_resize_nchw(y, H2, W2)
        y = y.reshape(N, C1, P2)
        out = pl.pallas_call(
            functools.partial(_concat_conv2_kernel, H2=H2, W2=W2),
            out_shape=out_shape,
            grid=grid,
            in_specs=[pl.BlockSpec((B, C1, P2), lambda n: (n, 0, 0)),
                      pl.BlockSpec((B, C1, P2), lambda n: (n, 0, 0)),
                      mask_spec, w2_spec],
            out_specs=out_spec,
            scratch_shapes=[zbuf2_alloc],
            compiler_params=cparams,
        )(y, rem_flat, masks, w2g)

    return out.reshape(N, C2, H2, W2)   # (C, P) lane-dense block IS NCHW -- no transpose


# ----------------------------------------------------------------------------
# Pure-JAX reference (same numeric policy: bf16 conv inputs, f32 accumulation/IN)
# ----------------------------------------------------------------------------
def _ref_basic(x, w, stride, pad):
    y = jax.lax.conv_general_dilated(
        x.astype(jnp.bfloat16), w.astype(jnp.bfloat16), (stride, stride),
        [(pad, pad), (pad, pad)], dimension_numbers=('NCHW', 'OIHW', 'NCHW'),
        preferred_element_type=jnp.float32)
    mean = y.mean(axis=(2, 3), keepdims=True)
    var = ((y - mean) ** 2).mean(axis=(2, 3), keepdims=True)
    y = (y - mean) * jax.lax.rsqrt(var + EPS)
    return jnp.maximum(y, NEG_SLOPE * y)


def _ref_forward(x, rem, w1, w2):
    y = _ref_basic(x, w1, 2, 1)
    if y.shape[-2:] != rem.shape[-2:]:
        y = _nearest_resize_nchw(y, rem.shape[-2], rem.shape[-1])
    z = jnp.concatenate([y, rem], axis=1)
    return _ref_basic(z, w2, 1, 1)


if __name__ == "__main__":
    # Module config: in_channels=4, out_channels=8 -> conv2 has 16 in / 16 out channels.
    in_channels, out_channels = 4, 8
    N = 2

    key = jax.random.PRNGKey(0)
    kx, kr, kw1, kw2 = jax.random.split(key, 4)

    fan1 = in_channels * 3 * 3
    w1 = jax.random.uniform(kw1, (out_channels, in_channels, 3, 3), jnp.float32,
                            -1.0 / np.sqrt(fan1), 1.0 / np.sqrt(fan1))
    c2 = out_channels * 2
    fan2 = c2 * 3 * 3
    w2 = jax.random.uniform(kw2, (c2, c2, 3, 3), jnp.float32,
                            -1.0 / np.sqrt(fan2), 1.0 / np.sqrt(fan2))

    # --- main (fused, even-size) path -------------------------------------------------
    H = W = 16
    x = jax.random.normal(kx, (N, in_channels, H, W), dtype=jnp.float32)
    rem = jax.random.normal(kr, (N, out_channels, H // 2, W // 2), dtype=jnp.float32)

    out = jax.block_until_ready(conv2x_in_forward(x, rem, w1, w2))
    ref = jax.block_until_ready(_ref_forward(x, rem, w1, w2))
    assert out.shape == (N, 2 * out_channels, H // 2, W // 2), out.shape
    np.testing.assert_allclose(np.asarray(out.astype(jnp.float32)), np.asarray(ref),
                               atol=2e-2, rtol=2e-2)

    # --- rare (odd-size / resize) path ------------------------------------------------
    Ho = Wo = 15
    xo = jax.random.normal(kx, (N, in_channels, Ho, Wo), dtype=jnp.float32)
    remo = jax.random.normal(kr, (N, out_channels, Ho // 2, Wo // 2), dtype=jnp.float32)
    out_o = jax.block_until_ready(conv2x_in_forward(xo, remo, w1, w2))
    ref_o = jax.block_until_ready(_ref_forward(xo, remo, w1, w2))
    assert out_o.shape == (N, 2 * out_channels, Ho // 2, Wo // 2), out_o.shape
    np.testing.assert_allclose(np.asarray(out_o.astype(jnp.float32)), np.asarray(ref_o),
                               atol=2e-2, rtol=2e-2)

    print("KERNEL_OK")
</pallas_src>

<mosaic_0001>
module attributes {stable_mosaic.version = 11 : i64} {
  func.func @_fused_kernel(%arg0: i32, %arg1: memref<1x16x64xbf16, #tpu.memory_space<vmem>>, %arg2: memref<1x8x64xbf16, #tpu.memory_space<vmem>>, %arg3: memref<2x64xf32, #tpu.memory_space<vmem>>, %arg4: memref<8x12xbf16, #tpu.memory_space<vmem>>, %arg5: memref<8x24xbf16, #tpu.memory_space<vmem>>, %arg6: memref<3x16x48xbf16, #tpu.memory_space<vmem>>, %arg7: memref<1x16x64xbf16, #tpu.memory_space<vmem>>, %arg8: memref<16x73xbf16, #tpu.memory_space<vmem>>, %arg9: memref<16x82xbf16, #tpu.memory_space<vmem>>) attributes {dimension_semantics = [#tpu.dimension_semantics<parallel>], iteration_bounds = array<i64: 2>, scalar_prefetch = 0 : i64, scratch_operands = 2 : i64, tpu.core_type = #tpu.core_type<tc>, window_params = [{transform_indices = @transform_0, window_bounds = array<i64: 1, 16, 64>}, {transform_indices = @transform_1, window_bounds = array<i64: 1, 8, 64>}, {pipeline_mode = #tpu.pipeline_mode<synchronous>, transform_indices = @transform_2, window_bounds = array<i64: 2, 64>}, {pipeline_mode = #tpu.pipeline_mode<synchronous>, transform_indices = @transform_3, window_bounds = array<i64: 8, 12>}, {pipeline_mode = #tpu.pipeline_mode<synchronous>, transform_indices = @transform_4, window_bounds = array<i64: 8, 24>}, {pipeline_mode = #tpu.pipeline_mode<synchronous>, transform_indices = @transform_5, window_bounds = array<i64: 3, 16, 48>}, {transform_indices = @transform_6, window_bounds = array<i64: 1, 16, 64>}]} {
    %c0 = arith.constant 0 : index
    %c0_0 = arith.constant 0 : index
    %0 = vector.load %arg3[%c0, %c0_0] : memref<2x64xf32, #tpu.memory_space<vmem>>, vector<1x64xf32>
    %c1 = arith.constant 1 : index
    %c0_1 = arith.constant 0 : index
    %1 = vector.load %arg3[%c1, %c0_1] : memref<2x64xf32, #tpu.memory_space<vmem>>, vector<1x64xf32>
    %cst = arith.constant 0.000000e+00 : bf16
    %2 = vector.broadcast %cst : bf16 to vector<16x9xbf16>
    %c0_2 = arith.constant 0 : index
    %c0_3 = arith.constant 0 : index
    %3 = vector.load %arg8[%c0_2, %c0_3] : memref<16x73xbf16, #tpu.memory_space<vmem>>, vector<16x9xbf16>
    tpu.vector_store %arg8[%c0_2, %c0_3], %2 {strides = array<i32>} : memref<16x73xbf16, #tpu.memory_space<vmem>>, vector<16x9xbf16>,
    %cst_4 = arith.constant 0.000000e+00 : bf16
    %4 = vector.broadcast %cst_4 : bf16 to vector<16x9xbf16>
    %c0_5 = arith.constant 0 : index
    %c0_6 = arith.constant 0 : index
    %5 = vector.load %arg9[%c0_5, %c0_6] : memref<16x82xbf16, #tpu.memory_space<vmem>>, vector<16x9xbf16>
    tpu.vector_store %arg9[%c0_5, %c0_6], %4 {strides = array<i32>} : memref<16x82xbf16, #tpu.memory_space<vmem>>, vector<16x9xbf16>,
    %c0_7 = arith.constant 0 : index
    %c73 = arith.constant 73 : index
    %6 = vector.load %arg9[%c0_7, %c73] : memref<16x82xbf16, #tpu.memory_space<vmem>>, vector<16x9xbf16>
    tpu.vector_store %arg9[%c0_7, %c73], %4 {strides = array<i32>} : memref<16x82xbf16, #tpu.memory_space<vmem>>, vector<16x9xbf16>,
    %c0_8 = arith.constant 0 : index
    %c0_9 = arith.constant 0 : index
    %c0_10 = arith.constant 0 : index
    %7 = vector.load %arg1[%c0_8, %c0_9, %c0_10] : memref<1x16x64xbf16, #tpu.memory_space<vmem>>, vector<1x16x64xbf16>
    %8 = vector.shape_cast %7 : vector<1x16x64xbf16> to vector<16x64xbf16>
    %c0_11 = arith.constant 0 : index
    %c9 = arith.constant 9 : index
    %9 = vector.load %arg8[%c0_11, %c9] : memref<16x73xbf16, #tpu.memory_space<vmem>>, vector<16x64xbf16>
    tpu.vector_store %arg8[%c0_11, %c9], %8 {strides = array<i32>} : memref<16x73xbf16, #tpu.memory_space<vmem>>, vector<16x64xbf16>,
    %c12 = arith.constant 12 : index
    %c0_12 = arith.constant 0 : index
    %10 = vector.load %arg8[%c12, %c0_12] : memref<16x73xbf16, #tpu.memory_space<vmem>>, vector<4x64xbf16>
    %c4 = arith.constant 4 : index
    %c8 = arith.constant 8 : index
    %11 = vector.load %arg8[%c4, %c8] : memref<16x73xbf16, #tpu.memory_space<vmem>>, vector<4x64xbf16>
    %c12_13 = arith.constant 12 : index
    %c8_14 = arith.constant 8 : index
    %12 = vector.load %arg8[%c12_13, %c8_14] : memref<16x73xbf16, #tpu.memory_space<vmem>>, vector<4x64xbf16>
    %13 = tpu.concatenate %10, %11, %12 in 0 : vector<4x64xbf16>, vector<4x64xbf16>, vector<4x64xbf16> -> vector<12x64xbf16>
    %c8_15 = arith.constant 8 : index
    %c1_16 = arith.constant 1 : index
    %14 = vector.load %arg8[%c8_15, %c1_16] : memref<16x73xbf16, #tpu.memory_space<vmem>>, vector<4x64xbf16>
    %c12_17 = arith.constant 12 : index
    %c1_18 = arith.constant 1 : index
    %15 = vector.load %arg8[%c12_17, %c1_18] : memref<16x73xbf16, #tpu.memory_space<vmem>>, vector<4x64xbf16>
    %c0_19 = arith.constant 0 : index
    %c9_20 = arith.constant 9 : index
    %16 = vector.load %arg8[%c0_19, %c9_20] : memref<16x73xbf16, #tpu.memory_space<vmem>>, vector<4x64xbf16>
    %c4_21 = arith.constant 4 : index
    %c9_22 = arith.constant 9 : index
    %17 = vector.load %arg8[%c4_21, %c9_22] : memref<16x73xbf16, #tpu.memory_space<vmem>>, vector<4x64xbf16>
    %c8_23 = arith.constant 8 : index
    %c9_24 = arith.constant 9 : index
    %18 = vector.load %arg8[%c8_23, %c9_24] : memref<16x73xbf16, #tpu.memory_space<vmem>>, vector<4x64xbf16>
    %c12_25 = arith.constant 12 : index
    %c9_26 = arith.constant 9 : index
    %19 = vector.load %arg8[%c12_25, %c9_26] : memref<16x73xbf16, #tpu.memory_space<vmem>>, vector<4x64xbf16>
    %20 = tpu.concatenate %14, %15, %16, %17, %18, %19 in 0 : vector<4x64xbf16>, vector<4x64xbf16>, vector<4x64xbf16>, vector<4x64xbf16>, vector<4x64xbf16>, vector<4x64xbf16> -> vector<24x64xbf16>
    %c0_27 = arith.constant 0 : index
    %c0_28 = arith.constant 0 : index
    %21 = vector.load %arg4[%c0_27, %c0_28] : memref<8x12xbf16, #tpu.memory_space<vmem>>, vector<8x12xbf16>
    %cst_29 = arith.constant dense<0.000000e+00> : vector<8x64xf32>
    %22 = tpu.matmul %21, %13, %cst_29 {dimension_numbers = #tpu.dot_dimension_numbers<[1], [0], [0], [1], [0, 0, 1, 1], [], []>} : vector<8x12xbf16>, vector<12x64xbf16>, vector<8x64xf32> -> vector<8x64xf32>
    %23 = vector.broadcast %0 : vector<1x64xf32> to vector<8x64xf32>
    %24 = arith.mulf %22, %23 : vector<8x64xf32>
    %c0_30 = arith.constant 0 : index
    %c0_31 = arith.constant 0 : index
    %25 = vector.load %arg5[%c0_30, %c0_31] : memref<8x24xbf16, #tpu.memory_space<vmem>>, vector<8x24xbf16>
    %cst_32 = arith.constant dense<0.000000e+00> : vector<8x64xf32>
    %26 = tpu.matmul %25, %20, %cst_32 {dimension_numbers = #tpu.dot_dimension_numbers<[1], [0], [0], [1], [0, 0, 1, 1], [], []>} : vector<8x24xbf16>, vector<24x64xbf16>, vector<8x64xf32> -> vector<8x64xf32>
    %27 = arith.addf %24, %26 : vector<8x64xf32>
    %cst_33 = arith.constant dense<0.000000e+00> : vector<8xf32>
    %28 = vector.multi_reduction <add>, %27, %cst_33 [1] : vector<8x64xf32> to vector<8xf32>
    %29 = vector.shape_cast %28 : vector<8xf32> to vector<8x1xf32>
    %cst_34 = arith.constant 1.562500e-02 : f32
    %30 = vector.broadcast %cst_34 : f32 to vector<8x1xf32>
    %31 = arith.mulf %29, %30 : vector<8x1xf32>
    %32 = vector.broadcast %31 : vector<8x1xf32> to vector<8x64xf32>
    %33 = arith.subf %27, %32 : vector<8x64xf32>
    %34 = arith.mulf %33, %33 : vector<8x64xf32>
    %cst_35 = arith.constant dense<0.000000e+00> : vector<8xf32>
    %35 = vector.multi_reduction <add>, %34, %cst_35 [1] : vector<8x64xf32> to vector<8xf32>
    %36 = vector.shape_cast %35 : vector<8xf32> to vector<8x1xf32>
    %cst_36 = arith.constant 1.562500e-02 : f32
    %37 = vector.broadcast %cst_36 : f32 to vector<8x1xf32>
    %38 = arith.mulf %36, %37 : vector<8x1xf32>
    %cst_37 = arith.constant 9.99999974E-6 : f32
    %39 = vector.broadcast %cst_37 : f32 to vector<8x1xf32>
    %40 = arith.addf %38, %39 : vector<8x1xf32>
    %41 = math.rsqrt %40 : vector<8x1xf32>
    %42 = vector.broadcast %41 : vector<8x1xf32> to vector<8x64xf32>
    %43 = arith.mulf %33, %42 : vector<8x64xf32>
    %cst_38 = arith.constant 0.00999999977 : f32
    %44 = vector.broadcast %cst_38 : f32 to vector<8x64xf32>
    %45 = arith.mulf %44, %43 : vector<8x64xf32>
    %46 = arith.maximumf %43, %45 : vector<8x64xf32>
    %47 = arith.truncf %46 : vector<8x64xf32> to vector<8x64xbf16>
    %c0_39 = arith.constant 0 : index
    %c9_40 = arith.constant 9 : index
    %48 = vector.load %arg9[%c0_39, %c9_40] : memref<16x82xbf16, #tpu.memory_space<vmem>>, vector<8x64xbf16>
    tpu.vector_store %arg9[%c0_39, %c9_40], %47 {strides = array<i32>} : memref<16x82xbf16, #tpu.memory_space<vmem>>, vector<8x64xbf16>,
    %c0_41 = arith.constant 0 : index
    %c0_42 = arith.constant 0 : index
    %c0_43 = arith.constant 0 : index
    %49 = vector.load %arg2[%c0_41, %c0_42, %c0_43] : memref<1x8x64xbf16, #tpu.memory_space<vmem>>, vector<1x8x64xbf16>
    %50 = vector.shape_cast %49 : vector<1x8x64xbf16> to vector<8x64xbf16>
    %c8_44 = arith.constant 8 : index
    %c9_45 = arith.constant 9 : index
    %51 = vector.load %arg9[%c8_44, %c9_45] : memref<16x82xbf16, #tpu.memory_space<vmem>>, vector<8x64xbf16>
    tpu.vector_store %arg9[%c8_44, %c9_45], %50 {strides = array<i32>} : memref<16x82xbf16, #tpu.memory_space<vmem>>, vector<8x64xbf16>,
    %c1_46 = arith.constant 1 : index
    %c0_47 = arith.constant 0 : index
    %c0_48 = arith.constant 0 : index
    %52 = vector.load %arg6[%c1_46, %c0_47, %c0_48] : memref<3x16x48xbf16, #tpu.memory_space<vmem>>, vector<1x16x48xbf16>
    %53 = vector.shape_cast %52 : vector<1x16x48xbf16> to vector<16x48xbf16>
    %c0_49 = arith.constant 0 : index
    %c1_50 = arith.constant 1 : index
    %54 = vector.load %arg9[%c0_49, %c1_50] : memref<16x82xbf16, #tpu.memory_space<vmem>>, vector<16x64xbf16>
    %c0_51 = arith.constant 0 : index
    %c9_52 = arith.constant 9 : index
    %55 = vector.load %arg9[%c0_51, %c9_52] : memref<16x82xbf16, #tpu.memory_space<vmem>>, vector<16x64xbf16>
    %c0_53 = arith.constant 0 : index
    %c17 = arith.constant 17 : index
    %56 = vector.load %arg9[%c0_53, %c17] : memref<16x82xbf16, #tpu.memory_space<vmem>>, vector<16x64xbf16>
    %57 = tpu.concatenate %54, %55, %56 in 0 : vector<16x64xbf16>, vector<16x64xbf16>, vector<16x64xbf16> -> vector<48x64xbf16>
    %cst_54 = arith.constant dense<0.000000e+00> : vector<16x64xf32>
    %58 = tpu.matmul %53, %57, %cst_54 {dimension_numbers = #tpu.dot_dimension_numbers<[1], [0], [0], [1], [0, 0, 1, 1], [], []>} : vector<16x48xbf16>, vector<48x64xbf16>, vector<16x64xf32> -> vector<16x64xf32>
    %c0_55 = arith.constant 0 : index
    %c0_56 = arith.constant 0 : index
    %c0_57 = arith.constant 0 : index
    %59 = vector.load %arg6[%c0_55, %c0_56, %c0_57] : memref<3x16x48xbf16, #tpu.memory_space<vmem>>, vector<1x16x48xbf16>
    %60 = vector.shape_cast %59 : vector<1x16x48xbf16> to vector<16x48xbf16>
    %c0_58 = arith.constant 0 : index
    %c0_59 = arith.constant 0 : index
    %61 = vector.load %arg9[%c0_58, %c0_59] : memref<16x82xbf16, #tpu.memory_space<vmem>>, vector<16x64xbf16>
    %c0_60 = arith.constant 0 : index
    %c8_61 = arith.constant 8 : index
    %62 = vector.load %arg9[%c0_60, %c8_61] : memref<16x82xbf16, #tpu.memory_space<vmem>>, vector<16x64xbf16>
    %c0_62 = arith.constant 0 : index
    %c16 = arith.constant 16 : index
    %63 = vector.load %arg9[%c0_62, %c16] : memref<16x82xbf16, #tpu.memory_space<vmem>>, vector<16x64xbf16>
    %64 = tpu.concatenate %61, %62, %63 in 0 : vector<16x64xbf16>, vector<16x64xbf16>, vector<16x64xbf16> -> vector<48x64xbf16>
    %cst_63 = arith.constant dense<0.000000e+00> : vector<16x64xf32>
    %65 = tpu.matmul %60, %64, %cst_63 {dimension_numbers = #tpu.dot_dimension_numbers<[1], [0], [0], [1], [0, 0, 1, 1], [], []>} : vector<16x48xbf16>, vector<48x64xbf16>, vector<16x64xf32> -> vector<16x64xf32>
    %66 = vector.broadcast %0 : vector<1x64xf32> to vector<16x64xf32>
    %67 = arith.mulf %65, %66 : vector<16x64xf32>
    %68 = arith.addf %58, %67 : vector<16x64xf32>
    %c2 = arith.constant 2 : index
    %c0_64 = arith.constant 0 : index
    %c0_65 = arith.constant 0 : index
    %69 = vector.load %arg6[%c2, %c0_64, %c0_65] : memref<3x16x48xbf16, #tpu.memory_space<vmem>>, vector<1x16x48xbf16>
    %70 = vector.shape_cast %69 : vector<1x16x48xbf16> to vector<16x48xbf16>
    %c0_66 = arith.constant 0 : index
    %c2_67 = arith.constant 2 : index
    %71 = vector.load %arg9[%c0_66, %c2_67] : memref<16x82xbf16, #tpu.memory_space<vmem>>, vector<16x64xbf16>
    %c0_68 = arith.constant 0 : index
    %c10 = arith.constant 10 : index
    %72 = vector.load %arg9[%c0_68, %c10] : memref<16x82xbf16, #tpu.memory_space<vmem>>, vector<16x64xbf16>
    %c0_69 = arith.constant 0 : index
    %c18 = arith.constant 18 : index
    %73 = vector.load %arg9[%c0_69, %c18] : memref<16x82xbf16, #tpu.memory_space<vmem>>, vector<16x64xbf16>
    %74 = tpu.concatenate %71, %72, %73 in 0 : vector<16x64xbf16>, vector<16x64xbf16>, vector<16x64xbf16> -> vector<48x64xbf16>
    %cst_70 = arith.constant dense<0.000000e+00> : vector<16x64xf32>
    %75 = tpu.matmul %70, %74, %cst_70 {dimension_numbers = #tpu.dot_dimension_numbers<[1], [0], [0], [1], [0, 0, 1, 1], [], []>} : vector<16x48xbf16>, vector<48x64xbf16>, vector<16x64xf32> -> vector<16x64xf32>
    %76 = vector.broadcast %1 : vector<1x64xf32> to vector<16x64xf32>
    %77 = arith.mulf %75, %76 : vector<16x64xf32>
    %78 = arith.addf %68, %77 : vector<16x64xf32>
    %cst_71 = arith.constant dense<0.000000e+00> : vector<16xf32>
    %79 = vector.multi_reduction <add>, %78, %cst_71 [1] : vector<16x64xf32> to vector<16xf32>
    %80 = vector.shape_cast %79 : vector<16xf32> to vector<16x1xf32>
    %cst_72 = arith.constant 1.562500e-02 : f32
    %81 = vector.broadcast %cst_72 : f32 to vector<16x1xf32>
    %82 = arith.mulf %80, %81 : vector<16x1xf32>
    %83 = vector.broadcast %82 : vector<16x1xf32> to vector<16x64xf32>
    %84 = arith.subf %78, %83 : vector<16x64xf32>
    %85 = arith.mulf %84, %84 : vector<16x64xf32>
    %cst_73 = arith.constant dense<0.000000e+00> : vector<16xf32>
    %86 = vector.multi_reduction <add>, %85, %cst_73 [1] : vector<16x64xf32> to vector<16xf32>
    %87 = vector.shape_cast %86 : vector<16xf32> to vector<16x1xf32>
    %cst_74 = arith.constant 1.562500e-02 : f32
    %88 = vector.broadcast %cst_74 : f32 to vector<16x1xf32>
    %89 = arith.mulf %87, %88 : vector<16x1xf32>
    %cst_75 = arith.constant 9.99999974E-6 : f32
    %90 = vector.broadcast %cst_75 : f32 to vector<16x1xf32>
    %91 = arith.addf %89, %90 : vector<16x1xf32>
    %92 = math.rsqrt %91 : vector<16x1xf32>
    %93 = vector.broadcast %92 : vector<16x1xf32> to vector<16x64xf32>
    %94 = arith.mulf %84, %93 : vector<16x64xf32>
    %cst_76 = arith.constant 0.00999999977 : f32
    %95 = vector.broadcast %cst_76 : f32 to vector<16x64xf32>
    %96 = arith.mulf %95, %94 : vector<16x64xf32>
    %97 = arith.maximumf %94, %96 : vector<16x64xf32>
    %98 = arith.truncf %97 : vector<16x64xf32> to vector<16x64xbf16>
    %c0_77 = arith.constant 0 : index
    %c0_78 = arith.constant 0 : index
    %c0_79 = arith.constant 0 : index
    %99 = vector.load %arg7[%c0_77, %c0_78, %c0_79] : memref<1x16x64xbf16, #tpu.memory_space<vmem>>, vector<1x16x64xbf16>
    %100 = vector.shape_cast %99 : vector<1x16x64xbf16> to vector<16x64xbf16>
    %101 = vector.shape_cast %98 : vector<16x64xbf16> to vector<1x16x64xbf16>
    tpu.vector_store %arg7[%c0_77, %c0_78, %c0_79], %101 {strides = array<i32>} : memref<1x16x64xbf16, #tpu.memory_space<vmem>>, vector<1x16x64xbf16>,
    return
  }
  func.func @transform_0(%arg0: i32) -> (i32, i32, i32) {
    %c0_i32 = arith.constant 0 : i32
    %c0_i32_0 = arith.constant 0 : i32
    %c0_i32_1 = arith.constant 0 : i32
    return %arg0, %c0_i32, %c0_i32_0 : i32, i32, i32
  }
  func.func @transform_1(%arg0: i32) -> (i32, i32, i32) {
    %c0_i32 = arith.constant 0 : i32
    %c0_i32_0 = arith.constant 0 : i32
    %c0_i32_1 = arith.constant 0 : i32
    return %arg0, %c0_i32, %c0_i32_0 : i32, i32, i32
  }
  func.func @transform_2(%arg0: i32) -> (i32, i32) {
    %c0_i32 = arith.constant 0 : i32
    %c0_i32_0 = arith.constant 0 : i32
    %c0_i32_1 = arith.constant 0 : i32
    return %c0_i32, %c0_i32_0 : i32, i32
  }
  func.func @transform_3(%arg0: i32) -> (i32, i32) {
    %c0_i32 = arith.constant 0 : i32
    %c0_i32_0 = arith.constant 0 : i32
    %c0_i32_1 = arith.constant 0 : i32
    return %c0_i32, %c0_i32_0 : i32, i32
  }
  func.func @transform_4(%arg0: i32) -> (i32, i32) {
    %c0_i32 = arith.constant 0 : i32
    %c0_i32_0 = arith.constant 0 : i32
    %c0_i32_1 = arith.constant 0 : i32
    return %c0_i32, %c0_i32_0 : i32, i32
  }
  func.func @transform_5(%arg0: i32) -> (i32, i32, i32) {
    %c0_i32 = arith.constant 0 : i32
    %c0_i32_0 = arith.constant 0 : i32
    %c0_i32_1 = arith.constant 0 : i32
    %c0_i32_2 = arith.constant 0 : i32
    return %c0_i32, %c0_i32_0, %c0_i32_1 : i32, i32, i32
  }
  func.func @transform_6(%arg0: i32) -> (i32, i32, i32) {
    %c0_i32 = arith.constant 0 : i32
    %c0_i32_0 = arith.constant 0 : i32
    %c0_i32_1 = arith.constant 0 : i32
    return %arg0, %c0_i32, %c0_i32_0 : i32, i32, i32
  }
}

</mosaic_0001>

<llo_original>
// kernel: tpu_custom_call.1
$region0: #{tpu_custom_call.1}
  #allocation0 [shape = 'u32[]', space=smem, size = 0x4, offset = 0x4, fixed_abs, tag = 'smem constant byte address 0x4 - core index']
  #allocation1 [shape = 'u32[72,128]{1,0:T(1,128)}', space=vmem, size = 0x9000, scoped, tag = 'internal scratch']
  #allocation2 [shape = 'bf16[16,73]{1,0:T(8,128)(2,1)}', space=vmem, size = 0x1000, scoped, tag = 'scratch operand']
  #allocation3 [shape = 'bf16[16,82]{1,0:T(8,128)(2,1)}', space=vmem, size = 0x1000, scoped, tag = 'scratch operand']
  %s0 = inlined_call_operand.hbm [shape: bf16[2,16,64], index: 0, kind: input, shape index: {}]
  %s1 = inlined_call_operand.hbm [shape: bf16[2,8,64], index: 1, kind: input, shape index: {}]
  %s2 = inlined_call_operand.hbm [shape: f32[2,64], index: 2, kind: input, shape index: {}]
  %s3 = inlined_call_operand.hbm [shape: bf16[8,12], index: 3, kind: input, shape index: {}]
  %s4 = inlined_call_operand.hbm [shape: bf16[8,24], index: 4, kind: input, shape index: {}]
  %s5 = inlined_call_operand.hbm [shape: bf16[3,16,48], index: 5, kind: input, shape index: {}]
  %s6 = inlined_call_operand.hbm [shape: bf16[2,16,64], index: 6, kind: output, shape index: {}]
  %s7 = sld [smem:[#allocation0]]
  $region81: #{tpu_custom_call.1} parent=0
    _
  %s9 = ssub.s32 1, %s7
  %s10 = scalar_select 0, %s9, %s7
  $region1: #{tpu_custom_call.1} parent=0
    #allocation4 [shape = 'u8[8192]{0}', space=vmem, size = 0x2000, scoped, tag = 'input window, operand 0']
    #allocation5 [shape = 's32[2]{0}', space=sflag, size = 0x8, scoped, tag = 'scoped memory for tpu_custom_call.1']
    #allocation6 [shape = 's32[2]{0}', space=sflag, size = 0x8, scoped, tag = 'scoped memory for tpu_custom_call.1']
    #allocation7 [shape = 'u8[4096]{0}', space=vmem, size = 0x1000, scoped, tag = 'input window, operand 1']
    #allocation8 [shape = 's32[2]{0}', space=sflag, size = 0x8, scoped, tag = 'scoped memory for tpu_custom_call.1']
    #allocation9 [shape = 'u8[1024]{0}', space=vmem, size = 0x400, scoped, tag = 'input window, operand 2, single buffered']
    #allocation10 [shape = 'u8[2048]{0}', space=vmem, size = 0x800, scoped, tag = 'input window, operand 3, single buffered']
    #allocation11 [shape = 's32[1]{0}', space=sflag, size = 0x4, scoped, tag = 'scoped memory for tpu_custom_call.1']
    #allocation12 [shape = 'u8[2048]{0}', space=vmem, size = 0x800, scoped, tag = 'input window, operand 4, single buffered']
    #allocation13 [shape = 'u8[12288]{0}', space=vmem, size = 0x3000, scoped, tag = 'input window, operand 5, single buffered']
    #allocation14 [shape = 's32[1]{0}', space=sflag, size = 0x4, scoped, tag = 'scoped memory for tpu_custom_call.1']
    #allocation15 [shape = 'u8[8192]{0}', space=vmem, size = 0x2000, scoped, tag = 'output window, operand 0']
    %11 = vsyncpa [#allocation5], 0
    %s12 = scalar_lea.sflag [#allocation5], 1
    %13 = vsyncpa %s12, 0
    %14 = vsyncpa [#allocation8], 0
    %s15 = scalar_lea.sflag [#allocation8], 1
    %16 = vsyncpa %s15, 0
    %17 = vsyncpa [#allocation11], 0
    %18 = vsyncpa [#allocation14], 0
    %19 = vsyncpa [#allocation6], 0
    %s20 = scalar_lea.sflag [#allocation6], 1
    %21 = vsyncpa %s20, 0
    loop: start=0, step=1, limit=4
    $region2: #{tpu_custom_call.1} parent=1 // loop_pre_header
      _
    $region3: #{tpu_custom_call.1} parent=1 // loop_header
      %s23 = sphi 0, %s27
      %p24 = scmp.ge.s32.totalorder %s23, 4
      %s33 = sphi 0, %s35
      %s36 = sphi 0, %s33
      %s37 = sphi 0, %s36
      %s53 = sphi 0, %s37
      %s59 = sphi 0, %s61
      %s62 = sphi 0, %s59
      %s63 = sphi 0, %s62
      %s79 = sphi 0, %s63
      %s83 = sphi 0, %s83
      %s85 = sphi 0, %s83
      %s86 = sphi 0, %s85
      %s100 = sphi 0, %s86
      %s104 = sphi 0, %s104
      %s106 = sphi 0, %s104
      %s107 = sphi 0, %s106
      %s121 = sphi 0, %s107
      %s125 = sphi 0, %s125
      %s127 = sphi 0, %s125
      %s128 = sphi 0, %s127
      %s142 = sphi 0, %s128
      %s146 = sphi 0, %s146
      %s148 = sphi 0, %s146
      %s149 = sphi 0, %s148
      %s163 = sphi 0, %s149
      %s169 = sphi 0, %s171
      %s172 = sphi 0, %s169
      %s173 = sphi 0, %s172
      %s189 = sphi 0, %s173
    $region4: #{tpu_custom_call.1} parent=1 // loop_header_branch
      %26 = sbr.rel (%p24) target = $region8
    $region5: #{tpu_custom_call.1} parent=1 // loop_body
      %s28 = ssub.s32 %s23, 1
      %s29 = ssub.s32 %s23, 2
      %s30 = sadd.s32 %s23, 1
      %s31 = ssub.s32 %s23, %s30
      %p32 = scmp.eq.s32.totalorder %s31, 0
      %s34 = sadd.s32 %s33, 1
      %s35 = scalar_select %p32, %s33, %s34
      %p38 = pneg %p32
      %p39 = scmp.eq.s32.totalorder %s23, 1
      %p40 = por %p38, %p39
      %p41 = scmp.ne.s32.totalorder %s33, %s36
      %p42 = scmp.eq.s32.totalorder %s23, 0
      %p43 = por %p41, %p42
      %p44 = scmp.ne.s32.totalorder %s33, %s36
      %p45 = scmp.eq.s32.totalorder %s28, 1
      %p46 = por %p44, %p45
      %p47 = scmp.ne.s32.totalorder %s36, %s37
      %p48 = scmp.eq.s32.totalorder %s28, 0
      %p49 = por %p47, %p48
      %p50 = scmp.ne.s32.totalorder %s36, %s37
      %p51 = scmp.eq.s32.totalorder %s29, 1
      %p52 = por %p50, %p51
      %p54 = scmp.ne.s32.totalorder %s37, %s53
      %p55 = scmp.eq.s32.totalorder %s29, 0
      %p56 = por %p54, %p55
      %s57 = ssub.s32 %s23, %s30
      %p58 = scmp.eq.s32.totalorder %s57, 0
      %s60 = sadd.s32 %s59, 1
      %s61 = scalar_select %p58, %s59, %s60
      %p64 = pneg %p58
      %p65 = scmp.eq.s32.totalorder %s23, 1
      %p66 = por %p64, %p65
      %p67 = scmp.ne.s32.totalorder %s59, %s62
      %p68 = scmp.eq.s32.totalorder %s23, 0
      %p69 = por %p67, %p68
      %p70 = scmp.ne.s32.totalorder %s59, %s62
      %p71 = scmp.eq.s32.totalorder %s28, 1
      %p72 = por %p70, %p71
      %p73 = scmp.ne.s32.totalorder %s62, %s63
      %p74 = scmp.eq.s32.totalorder %s28, 0
      %p75 = por %p73, %p74
      %p76 = scmp.ne.s32.totalorder %s62, %s63
      %p77 = scmp.eq.s32.totalorder %s29, 1
      %p78 = por %p76, %p77
      %p80 = scmp.ne.s32.totalorder %s63, %s79
      %p81 = scmp.eq.s32.totalorder %s29, 0
      %p82 = por %p80, %p81
      %s84 = sadd.s32 %s83, 1
      %p87 = scmp.eq.s32.totalorder %s23, 1
      %p88 = scmp.ne.s32.totalorder %s83, %s85
      %p89 = scmp.eq.s32.totalorder %s23, 0
      %p90 = por %p88, %p89
      %p91 = scmp.ne.s32.totalorder %s83, %s85
      %p92 = scmp.eq.s32.totalorder %s28, 1
      %p93 = por %p91, %p92
      %p94 = scmp.ne.s32.totalorder %s85, %s86
      %p95 = scmp.eq.s32.totalorder %s28, 0
      %p96 = por %p94, %p95
      %p97 = scmp.ne.s32.totalorder %s85, %s86
      %p98 = scmp.eq.s32.totalorder %s29, 1
      %p99 = por %p97, %p98
      %p101 = scmp.ne.s32.totalorder %s86, %s100
      %p102 = scmp.eq.s32.totalorder %s29, 0
      %p103 = por %p101, %p102
      %s105 = sadd.s32 %s104, 1
      %p108 = scmp.eq.s32.totalorder %s23, 1
      %p109 = scmp.ne.s32.totalorder %s104, %s106
      %p110 = scmp.eq.s32.totalorder %s23, 0
      %p111 = por %p109, %p110
      %p112 = scmp.ne.s32.totalorder %s104, %s106
      %p113 = scmp.eq.s32.totalorder %s28, 1
      %p114 = por %p112, %p113
      %p115 = scmp.ne.s32.totalorder %s106, %s107
      %p116 = scmp.eq.s32.totalorder %s28, 0
      %p117 = por %p115, %p116
      %p118 = scmp.ne.s32.totalorder %s106, %s107
      %p119 = scmp.eq.s32.totalorder %s29, 1
      %p120 = por %p118, %p119
      %p122 = scmp.ne.s32.totalorder %s107, %s121
      %p123 = scmp.eq.s32.totalorder %s29, 0
      %p124 = por %p122, %p123
      %s126 = sadd.s32 %s125, 1
      %p129 = scmp.eq.s32.totalorder %s23, 1
      %p130 = scmp.ne.s32.totalorder %s125, %s127
      %p131 = scmp.eq.s32.totalorder %s23, 0
      %p132 = por %p130, %p131
      %p133 = scmp.ne.s32.totalorder %s125, %s127
      %p134 = scmp.eq.s32.totalorder %s28, 1
      %p135 = por %p133, %p134
      %p136 = scmp.ne.s32.totalorder %s127, %s128
      %p137 = scmp.eq.s32.totalorder %s28, 0
      %p138 = por %p136, %p137
      %p139 = scmp.ne.s32.totalorder %s127, %s128
      %p140 = scmp.eq.s32.totalorder %s29, 1
      %p141 = por %p139, %p140
      %p143 = scmp.ne.s32.totalorder %s128, %s142
      %p144 = scmp.eq.s32.totalorder %s29, 0
      %p145 = por %p143, %p144
      %s147 = sadd.s32 %s146, 1
      %p150 = scmp.eq.s32.totalorder %s23, 1
      %p151 = scmp.ne.s32.totalorder %s146, %s148
      %p152 = scmp.eq.s32.totalorder %s23, 0
      %p153 = por %p151, %p152
      %p154 = scmp.ne.s32.totalorder %s146, %s148
      %p155 = scmp.eq.s32.totalorder %s28, 1
      %p156 = por %p154, %p155
      %p157 = scmp.ne.s32.totalorder %s148, %s149
      %p158 = scmp.eq.s32.totalorder %s28, 0
      %p159 = por %p157, %p158
      %p160 = scmp.ne.s32.totalorder %s148, %s149
      %p161 = scmp.eq.s32.totalorder %s29, 1
      %p162 = por %p160, %p161
      %p164 = scmp.ne.s32.totalorder %s149, %s163
      %p165 = scmp.eq.s32.totalorder %s29, 0
      %p166 = por %p164, %p165
      %s167 = ssub.s32 %s23, %s30
      %p168 = scmp.eq.s32.totalorder %s167, 0
      %s170 = sadd.s32 %s169, 1
      %s171 = scalar_select %p168, %s169, %s170
      %p174 = pneg %p168
      %p175 = scmp.eq.s32.totalorder %s23, 1
      %p176 = por %p174, %p175
      %p177 = scmp.ne.s32.totalorder %s169, %s172
      %p178 = scmp.eq.s32.totalorder %s23, 0
      %p179 = por %p177, %p178
      %p180 = scmp.ne.s32.totalorder %s169, %s172
      %p181 = scmp.eq.s32.totalorder %s28, 1
      %p182 = por %p180, %p181
      %p183 = scmp.ne.s32.totalorder %s172, %s173
      %p184 = scmp.eq.s32.totalorder %s28, 0
      %p185 = por %p183, %p184
      %p186 = scmp.ne.s32.totalorder %s172, %s173
      %p187 = scmp.eq.s32.totalorder %s29, 1
      %p188 = por %p186, %p187
      %p190 = scmp.ne.s32.totalorder %s173, %s189
      %p191 = scmp.eq.s32.totalorder %s29, 0
      %p192 = por %p190, %p191
      %p193 = scmp.le.s32.totalorder 1, %s23
      %p194 = scmp.lt.s32.totalorder %s23, 3
      %p195 = pnand %p193, %p194
      %p196 = pneg %p195
      // Predicated region
      $region9: #{tpu_custom_call.1} parent=5 // pred_check
        _
      $region10: #{tpu_custom_call.1} parent=5 // pred_check_branch
        %198 = sbr.rel (%p195) target = $region12
      $region11: #{tpu_custom_call.1} parent=5 // pred_region
        %s199 = ssub.s32 %s23, 1
        // Predicated region
        $region13: #{tpu_custom_call.1} parent=11 // pred_check
          %p200 = pneg %p96
        $region14: #{tpu_custom_call.1} parent=11 // pred_check_branch
          %202 = sbr.rel (%p200) target = $region16
        $region15: #{tpu_custom_call.1} parent=11 // pred_region
          %204 = vsyncadd [#allocation8], 0
          %s206 = sshll.u32 %s2, 4
          %s207 = int_to_ptr.hbm [resolvable:$true] %s206
          %s208 = sshll.u32 [#allocation9], 4
          %s209 = int_to_ptr.vmem [resolvable:$true] %s208
          %211 = dma.hbm_to_vmem [thread:$0]  %s207, 32, %s209, [#allocation8]
        $region16: #{tpu_custom_call.1} parent=11 // pred_fallthru
          _
        // Predicated region
        $region17: #{tpu_custom_call.1} parent=11 // pred_check
          %p212 = pneg %p117
        $region18: #{tpu_custom_call.1} parent=11 // pred_check_branch
          %214 = sbr.rel (%p212) target = $region20
        $region19: #{tpu_custom_call.1} parent=11 // pred_region
          %216 = vsyncadd [#allocation11], 0
          %s218 = sshll.u32 %s3, 4
          %s219 = int_to_ptr.hbm [resolvable:$true] %s218
          %s220 = sshll.u32 [#allocation10], 4
          %s221 = int_to_ptr.vmem [resolvable:$true] %s220
          %223 = dma.hbm_to_vmem [thread:$0]  %s219, 64, %s221, [#allocation11]
        $region20: #{tpu_custom_call.1} parent=11 // pred_fallthru
          _
        // Predicated region
        $region21: #{tpu_custom_call.1} parent=11 // pred_check
          %p224 = pneg %p138
        $region22: #{tpu_custom_call.1} parent=11 // pred_check_branch
          %226 = sbr.rel (%p224) target = $region24
        $region23: #{tpu_custom_call.1} parent=11 // pred_region
          %228 = vsyncadd [#allocation11], 0
          %s230 = sshll.u32 %s4, 4
          %s231 = int_to_ptr.hbm [resolvable:$true] %s230
          %s232 = sshll.u32 [#allocation12], 4
          %s233 = int_to_ptr.vmem [resolvable:$true] %s232
          %235 = dma.hbm_to_vmem [thread:$0]  %s231, 64, %s233, [#allocation11]
        $region24: #{tpu_custom_call.1} parent=11 // pred_fallthru
          _
        // Predicated region
        $region25: #{tpu_custom_call.1} parent=11 // pred_check
          %p236 = pneg %p159
        $region26: #{tpu_custom_call.1} parent=11 // pred_check_branch
          %238 = sbr.rel (%p236) target = $region28
        $region27: #{tpu_custom_call.1} parent=11 // pred_region
          %240 = vsyncadd [#allocation14], 0
          %s241 = sshll.u32 %s5, 4
          %s242 = int_to_ptr.hbm [resolvable:$true] %s241
          %s243 = sshll.u32 [#allocation13], 4
          %s244 = int_to_ptr.vmem [resolvable:$true] %s243
          %249 = dma.hbm_to_vmem [thread:$0]  %s242, 384, %s244, [#allocation14], 64, 64, 4
        $region28: #{tpu_custom_call.1} parent=11 // pred_fallthru
          _
      $region12: #{tpu_custom_call.1} parent=5 // pred_fallthru
        _
      %p250 = scmp.lt.s32.totalorder %s23, 2
      // Predicated region
      $region29: #{tpu_custom_call.1} parent=5 // pred_check
        %p251 = pneg %p250
      $region30: #{tpu_custom_call.1} parent=5 // pred_check_branch
        %253 = sbr.rel (%p251) target = $region32
      $region31: #{tpu_custom_call.1} parent=5 // pred_region
        // Predicated region
        $region33: #{tpu_custom_call.1} parent=31 // pred_check
          %p254 = pneg %p43
        $region34: #{tpu_custom_call.1} parent=31 // pred_check_branch
          %256 = sbr.rel (%p254) target = $region36
        $region35: #{tpu_custom_call.1} parent=31 // pred_region
          %s257 = sand.u32 %s33, 1
          %s258 = scalar_lea.sflag [#allocation5], %s257
          %s259 = sand.u32 %s33, 1
          %s260 = smul.addr %s259, 8
          %s261 = scalar_lea.vmem [#allocation4], %s260
          %263 = vsyncadd %s258, 0
          %s264 = smul.addr %s23, 2
          %s265 = smul.addr %s264, 4
          %s266 = scalar_lea.hbm %s0, %s265
          %s267 = sshll.u32 %s266, 4
          %s268 = int_to_ptr.hbm [resolvable:$true] %s267
          %s269 = sshll.u32 %s261, 4
          %s270 = int_to_ptr.vmem [resolvable:$true] %s269
          %275 = dma.hbm_to_vmem [thread:$0]  %s268, 128, %s270, %s258, 64, 64, 4
        $region36: #{tpu_custom_call.1} parent=31 // pred_fallthru
          _
        // Predicated region
        $region37: #{tpu_custom_call.1} parent=31 // pred_check
          %p276 = pneg %p69
        $region38: #{tpu_custom_call.1} parent=31 // pred_check_branch
          %278 = sbr.rel (%p276) target = $region40
        $region39: #{tpu_custom_call.1} parent=31 // pred_region
          %s279 = sand.u32 %s23, 1
          %s280 = scalar_lea.sflag [#allocation8], %s279
          %s281 = sand.u32 %s59, 1
          %s282 = smul.addr %s281, 4
          %s283 = scalar_lea.vmem [#allocation7], %s282
          %285 = vsyncadd %s280, 0
          %s286 = smul.addr %s23, 4
          %s287 = scalar_lea.hbm %s1, %s286
          %s289 = sshll.u32 %s287, 4
          %s290 = int_to_ptr.hbm [resolvable:$true] %s289
          %s291 = sshll.u32 %s283, 4
          %s292 = int_to_ptr.vmem [resolvable:$true] %s291
          %294 = dma.hbm_to_vmem [thread:$0]  %s290, 64, %s292, %s280
        $region40: #{tpu_custom_call.1} parent=31 // pred_fallthru
          _
      $region32: #{tpu_custom_call.1} parent=5 // pred_fallthru
        _
      %p295 = scmp.le.s32.totalorder 1, %s23
      %p296 = scmp.lt.s32.totalorder %s23, 3
      %p297 = pnand %p295, %p296
      %p298 = pneg %p297
      // Predicated region
      $region41: #{tpu_custom_call.1} parent=5 // pred_check
        _
      $region42: #{tpu_custom_call.1} parent=5 // pred_check_branch
        %300 = sbr.rel (%p297) target = $region44
      $region43: #{tpu_custom_call.1} parent=5 // pred_region
        %s301 = ssub.s32 %s23, 1
        %s302 = sand.u32 %s36, 1
        %s303 = scalar_lea.sflag [#allocation5], %s302
        %s304 = sand.u32 %s36, 1
        %s305 = smul.addr %s304, 8
        %s306 = scalar_lea.vmem [#allocation4], %s305
        // Predicated region
        $region45: #{tpu_custom_call.1} parent=43 // pred_check
          %p307 = pneg %p49
        $region46: #{tpu_custom_call.1} parent=43 // pred_check_branch
          %309 = sbr.rel (%p307) target = $region48
        $region47: #{tpu_custom_call.1} parent=43 // pred_region
          %311 = dma.done %s303, 128
        $region48: #{tpu_custom_call.1} parent=43 // pred_fallthru
          _
        %s312 = sand.u32 %s28, 1
        %s313 = scalar_lea.sflag [#allocation8], %s312
        %s314 = sand.u32 %s62, 1
        %s315 = smul.addr %s314, 4
        %s316 = scalar_lea.vmem [#allocation7], %s315
        // Predicated region
        $region49: #{tpu_custom_call.1} parent=43 // pred_check
          %p317 = pneg %p75
        $region50: #{tpu_custom_call.1} parent=43 // pred_check_branch
          %319 = sbr.rel (%p317) target = $region52
        $region51: #{tpu_custom_call.1} parent=43 // pred_region
          %321 = dma.done %s313, 64
        $region52: #{tpu_custom_call.1} parent=43 // pred_fallthru
          _
        // Predicated region
        $region53: #{tpu_custom_call.1} parent=43 // pred_check
          %p322 = pneg %p96
        $region54: #{tpu_custom_call.1} parent=43 // pred_check_branch
          %324 = sbr.rel (%p322) target = $region56
        $region55: #{tpu_custom_call.1} parent=43 // pred_region
          %326 = dma.done [#allocation8], 32
        $region56: #{tpu_custom_call.1} parent=43 // pred_fallthru
          _
        // Predicated region
        $region57: #{tpu_custom_call.1} parent=43 // pred_check
          %p327 = pneg %p117
        $region58: #{tpu_custom_call.1} parent=43 // pred_check_branch
          %329 = sbr.rel (%p327) target = $region60
        $region59: #{tpu_custom_call.1} parent=43 // pred_region
          %331 = dma.done [#allocation11], 64
        $region60: #{tpu_custom_call.1} parent=43 // pred_fallthru
          _
        // Predicated region
        $region61: #{tpu_custom_call.1} parent=43 // pred_check
          %p332 = pneg %p138
        $region62: #{tpu_custom_call.1} parent=43 // pred_check_branch
          %334 = sbr.rel (%p332) target = $region64
        $region63: #{tpu_custom_call.1} parent=43 // pred_region
          %336 = dma.done [#allocation11], 64
        $region64: #{tpu_custom_call.1} parent=43 // pred_fallthru
          _
        // Predicated region
        $region65: #{tpu_custom_call.1} parent=43 // pred_check
          %p337 = pneg %p159
        $region66: #{tpu_custom_call.1} parent=43 // pred_check_branch
          %339 = sbr.rel (%p337) target = $region68
        $region67: #{tpu_custom_call.1} parent=43 // pred_region
          %341 = dma.done [#allocation14], 384
        $region68: #{tpu_custom_call.1} parent=43 // pred_fallthru
          _
        %s342 = sand.u32 %s36, 1
        %s343 = scalar_lea.sflag [#allocation5], %s342
        %s344 = sand.u32 %s36, 1
        %s345 = smul.addr %s344, 8
        %s346 = scalar_lea.vmem [#allocation4], %s345
        %p347 = pneg %p49
        %p348 = pneg %p46
        %s349 = sand.u32 %s28, 1
        %s350 = scalar_lea.sflag [#allocation8], %s349
        %s351 = sand.u32 %s62, 1
        %s352 = smul.addr %s351, 4
        %s353 = scalar_lea.vmem [#allocation7], %s352
        %p354 = pneg %p75
        %p355 = pneg %p72
        %p356 = pneg %p96
        %p357 = pneg %p93
        %p358 = pneg %p117
        %p359 = pneg %p114
        %p360 = pneg %p138
        %p361 = pneg %p135
        %p362 = pneg %p159
        %p363 = pneg %p156
        %p364 = pneg %p185
        %p365 = pneg %p182
        %s366 = sand.u32 %s172, 1
        %s367 = scalar_lea.sflag [#allocation6], %s366
        %s368 = sand.u32 %s172, 1
        %s369 = smul.addr %s368, 8
        %s370 = scalar_lea.vmem [#allocation15], %s369
        %v372 = vld [vmem:[#allocation9] sm:$0x1]
        %v373 = vld [vmem:[#allocation9 + $0x1] sm:$0x1]
        %vm374 = vcmask 68608
        %375 = vst.msk [vmem:[#allocation2] sm:$0xf] %vm374, 0
        %376 = vst.msk [vmem:[#allocation2 + $0x4] sm:$0xf] %vm374, 0
        %377 = vst.msk [vmem:[#allocation3] sm:$0xf] %vm374, 0
        %378 = vst.msk [vmem:[#allocation3 + $0x4] sm:$0xf] %vm374, 0
        %vm379 = vcmask 667208
        %380 = vst.msk [vmem:[#allocation3] sm:$0xf] %vm379, 0
        %381 = vst.msk [vmem:[#allocation3 + $0x4] sm:$0xf] %vm379, 0
        %v382 = vld [vmem:[%s306] sm:$0xf]
        %v383 = vld [vmem:[%s306 + $0x4] sm:$0xf]
        %386 = vrot.lane.b32.xlu0 %v382, 9
        %v387 = vpop.permute.xlu0 %386
        %388 = vrot.lane.b32.xlu0 %v383, 9
        %v389 = vpop.permute.xlu0 %388
        %vm392 = vcmask 592968
        %393 = vst.msk [vmem:[#allocation2] sm:$0xf] %vm392, %v387
        %394 = vst.msk [vmem:[#allocation2 + $0x4] sm:$0xf] %vm392, %v389
        %v395 = vld [vmem:[#allocation2 + $0x4] sm:$0xc]
        %v396 = vld [vmem:[#allocation2] sm:$0xc]
        %v398 = vunpack.c.l.b16 %v395
        %v399 = vpack.c.b16 %v398, %v398
        %v400 = vrot.slane %v399, 2
        %v402 = vunpack.c.l.b16 %v396
        %v403 = vpack.c.b16 %v402, %v402
        %404 = vrot.lane.b32.xlu0 %v403, 120
        %v405 = vpop.permute.xlu0 %404
        %v406 = vrot.slane %v399, 6
        %407 = vrot.lane.b32.xlu0 %v406, 120
        %v408 = vpop.permute.xlu0 %407
        %vm409 = vcmask 1041408
        %v412 = vsel %vm409, %v400, %v405
        %vm413 = vcmask 1043456
        %v415 = vsel %vm413, %v412, %v408
        %v416 = vld [vmem:[#allocation2 + $0x4] sm:$0x3]
        %v417 = vld [vmem:[#allocation2] sm:$0x3]
        %v419 = vunpack.c.l.b16 %v417
        %v420 = vpack.c.b16 %v419, %v419
        %421 = vrot.lane.b32.xlu0 %v420, 120
        %v422 = vpop.permute.xlu0 %421
        %v424 = vunpack.c.l.b16 %v416
        %v425 = vpack.c.b16 %v424, %v424
        %426 = vrot.lane.b32.xlu0 %v425, 120
        %v427 = vpop.permute.xlu0 %426
        %428 = vrot.lane.b32.xlu0 %v399, 120
        %v429 = vpop.permute.xlu0 %428
        %v432 = vsel %vm409, %v416, %v395
        %v434 = vsel %vm413, %v432, %v422
        %vm435 = vcmask 1045504
        %v436 = vsel %vm435, %v434, %v405
        %v439 = vsel %vm409, %v427, %v429
        %v440 = vld [vmem:[#allocation10] sm:$0xf]
        %vm441 = vcmask 97280
        %v443 = vsel %vm441, %v440, 0
        %v445 = vsel %vm435, %v415, 0
        %447 = vmatpush.bf16.msra.mxu0 0
        %448 = vmatpush.bf16.msra.mxu0 0
        %449 = vmatpush.bf16.msra.mxu0 0
        %450 = vmatpush.bf16.msra.mxu0 0
        %451 = vmatpush.bf16.msra.mxu0 0
        %452 = vmatpush.bf16.msra.mxu0 0
        %453 = vmatpush.bf16.msra.mxu0 0
        %454 = vmatpush.bf16.msra.mxu0 %v445
        %455 = vmatmul.bf16.gmra.mxu0 %v443
        %v456 = vpop.f32.mrf.mxu0
        %v457 = vadd.f32 0.0, %v456
        %v458 = vpop.f32.mrf.mxu0
        %459 = vdwg.mxu0
        %v460 = vperm.slane %v372, 0
        %v461 = vmul.f32 %v457, %v460
        %v462 = vld [vmem:[#allocation12] sm:$0xf]
        %465 = vrot.lane.b32.xlu0 %v436, 127
        %v466 = vpop.permute.xlu0 %465
        %467 = vrot.lane.b32.xlu0 %v439, 127
        %v468 = vpop.permute.xlu0 %467
        %vm470 = vcmask 195584
        %v472 = vsel %vm470, %v462, 0
        %v475 = vsel %vm413, %v468, 0
        %477 = vmatpush.bf16.msra.mxu0 0
        %478 = vmatpush.bf16.msra.mxu0 0
        %479 = vmatpush.bf16.msra.mxu0 0
        %480 = vmatpush.bf16.msra.mxu0 0
        %481 = vmatpush.bf16.msra.mxu0 0
        %482 = vmatpush.bf16.msra.mxu0 0
        %483 = vmatpush.bf16.msra.mxu0 %v475
        %484 = vmatpush.bf16.msra.mxu0 %v466
        %485 = vmatmul.bf16.gmra.mxu0 %v472
        %v486 = vpop.f32.mrf.mxu0
        %v487 = vadd.f32 0.0, %v486
        %v488 = vpop.f32.mrf.mxu0
        %489 = vdwg.mxu0
        %v490 = vadd.f32 %v461, %v487
        %vm491 = vcmask 523264
        %v492 = vsel %vm491, %v490, 0.0
        %493 = vadd.xlane.f32.xlu0 %v492
        %v494 = vpop.xlane.xlu0 %493
        %v495 = vmul.f32 %v494, 0.015625
        %v496 = vsub.f32 %v490, %v495
        %v497 = vmul.f32 %v496, %v496
        %v498 = vsel %vm491, %v497, 0.0
        %499 = vadd.xlane.f32.xlu0 %v498
        %v500 = vpop.xlane.xlu0 %499
        %v501 = vmul.f32 %v500, 0.015625
        %v502 = vadd.f32 %v501, 1e-05
        %v503 = vrsqrt.pop %v502
        %v504 = vmul.f32 %v503, %v502
        %v505 = vmul.f32 %v504, %v503
        %v506 = vmul.f32 0.5, %v505
        %v507 = vsub.f32 1.5, %v506
        %v508 = vmul.f32 %v503, %v507
        %vm509 = vweird.f32 %v502
        %vm510 = vweird.f32 %v503
        %vm511 = vmor %vm509, %vm510
        %v512 = vsel %vm511, %v503, %v508
        %v513 = vmul.f32 %v496, %v512
        %v514 = vmul.f32 %v513, 0.01
        %v515 = vmax.f32 %v513, %v514
        %v516 = vpack.c.bf16 %v515, %v515
        %518 = vrot.lane.b32.xlu0 %v516, 9
        %v519 = vpop.permute.xlu0 %518
        %521 = vst.msk [vmem:[#allocation3] sm:$0xf] %vm392, %v519
        %v522 = vld [vmem:[%s316] sm:$0xf]
        %524 = vrot.lane.b32.xlu0 %v522, 9
        %v525 = vpop.permute.xlu0 %524
        %527 = vst.msk [vmem:[#allocation3 + $0x4] sm:$0xf] %vm392, %v525
        %s528 = scalar_lea.vmem [#allocation13], 8
        %v529 = vld [vmem:[%s528] sm:$0xf]
        %v530 = vld [vmem:[%s528 + $0x4] sm:$0xf]
        %v531 = vld [vmem:[#allocation3] sm:$0xf]
        %v532 = vld [vmem:[#allocation3 + $0x4] sm:$0xf]
        %v535 = vunpack.c.l.b16 %v531
        %v536 = vunpack.c.l.b16 %v532
        %v537 = vpack.c.b16 %v536, %v535
        %538 = vrot.lane.b32.xlu0 %v537, 120
        %v539 = vpop.permute.xlu0 %538
        %540 = vrot.lane.b32.xlu0 %v537, 112
        %v541 = vpop.permute.xlu0 %540
        %v542 = vld [vmem:[#allocation13] sm:$0xf]
        %v543 = vld [vmem:[#allocation13 + $0x4] sm:$0xf]
        %v549 = vunpack.c.l.b16 %v542
        %v550 = vunpack.c.l.b16 %v543
        %v551 = vpack.c.b16 %v550, %v549
        %vm552 = vcmask 392192
        %v554 = vsel %vm552, %v551, 0
        %556 = vmatpush.bf16.msra.mxu0 0
        %557 = vmatpush.bf16.msra.mxu0 0
        %558 = vmatpush.bf16.msra.mxu0 0
        %559 = vmatpush.bf16.msra.mxu0 0
        %560 = vmatpush.bf16.msra.mxu0 0
        %561 = vmatpush.bf16.msra.mxu0 %v541
        %562 = vmatpush.bf16.msra.mxu0 %v539
        %563 = vmatpush.bf16.msra.mxu0 %v537
        %564 = vmatmul.bf16.gmra.mxu0 %v554
        %v565 = vpop.f32.mrf.mxu0
        %v566 = vadd.f32 0.0, %v565
        %v567 = vpop.f32.mrf.mxu0
        %v568 = vadd.f32 0.0, %v567
        %569 = vdwg.mxu0
        %v570 = vmul.f32 %v566, %v460
        %v571 = vmul.f32 %v568, %v460
        %v574 = vunpack.c.l.b16 %v529
        %v575 = vunpack.c.l.b16 %v530
        %v576 = vpack.c.b16 %v575, %v574
        %577 = vrot.lane.b32.xlu0 %v537, 127
        %v578 = vpop.permute.xlu0 %577
        %579 = vrot.lane.b32.xlu0 %v539, 127
        %v580 = vpop.permute.xlu0 %579
        %581 = vrot.lane.b32.xlu0 %v541, 127
        %v582 = vpop.permute.xlu0 %581
        %v587 = vsel %vm552, %v576, 0
        %589 = vmatpush.bf16.msra.mxu0 0
        %590 = vmatpush.bf16.msra.mxu0 0
        %591 = vmatpush.bf16.msra.mxu0 0
        %592 = vmatpush.bf16.msra.mxu0 0
        %593 = vmatpush.bf16.msra.mxu0 0
        %594 = vmatpush.bf16.msra.mxu0 %v582
        %595 = vmatpush.bf16.msra.mxu0 %v580
        %596 = vmatpush.bf16.msra.mxu0 %v578
        %597 = vmatmul.bf16.gmra.mxu0 %v587
        %v598 = vpop.f32.mrf.mxu0
        %v599 = vadd.f32 %v570, %v598
        %v600 = vpop.f32.mrf.mxu0
        %v601 = vadd.f32 %v571, %v600
        %602 = vdwg.mxu0
        %s603 = scalar_lea.vmem [#allocation13], 16
        %v604 = vld [vmem:[%s603] sm:$0xf]
        %v605 = vld [vmem:[%s603 + $0x4] sm:$0xf]
        %v608 = vunpack.c.l.b16 %v604
        %v609 = vunpack.c.l.b16 %v605
        %v610 = vpack.c.b16 %v609, %v608
        %611 = vrot.lane.b32.xlu0 %v537, 126
        %v612 = vpop.permute.xlu0 %611
        %613 = vrot.lane.b32.xlu0 %v539, 126
        %v614 = vpop.permute.xlu0 %613
        %615 = vrot.lane.b32.xlu0 %v541, 126
        %v616 = vpop.permute.xlu0 %615
        %v621 = vsel %vm552, %v610, 0
        %623 = vmatpush.bf16.msra.mxu0 0
        %624 = vmatpush.bf16.msra.mxu0 0
        %625 = vmatpush.bf16.msra.mxu0 0
        %626 = vmatpush.bf16.msra.mxu0 0
        %627 = vmatpush.bf16.msra.mxu0 0
        %628 = vmatpush.bf16.msra.mxu0 %v616
        %629 = vmatpush.bf16.msra.mxu0 %v614
        %630 = vmatpush.bf16.msra.mxu0 %v612
        %631 = vmatmul.bf16.gmra.mxu0 %v621
        %v632 = vpop.f32.mrf.mxu0
        %v633 = vadd.f32 0.0, %v632
        %v634 = vpop.f32.mrf.mxu0
        %v635 = vadd.f32 0.0, %v634
        %636 = vdwg.mxu0
        %v637 = vperm.slane %v373, 0
        %v638 = vmul.f32 %v633, %v637
        %v639 = vmul.f32 %v635, %v637
        %v640 = vadd.f32 %v599, %v638
        %v641 = vadd.f32 %v601, %v639
        %v642 = vsel %vm491, %v640, 0.0
        %643 = vadd.xlane.f32.xlu0 %v642
        %v644 = vpop.xlane.xlu0 %643
        %v645 = vsel %vm491, %v641, 0.0
        %646 = vadd.xlane.f32.xlu0 %v645
        %v647 = vpop.xlane.xlu0 %646
        %v648 = vmul.f32 %v644, 0.015625
        %v649 = vmul.f32 %v647, 0.015625
        %v650 = vsub.f32 %v640, %v648
        %v651 = vsub.f32 %v641, %v649
        %v652 = vmul.f32 %v650, %v650
        %v653 = vmul.f32 %v651, %v651
        %v654 = vsel %vm491, %v652, 0.0
        %655 = vadd.xlane.f32.xlu0 %v654
        %v656 = vpop.xlane.xlu0 %655
        %v657 = vsel %vm491, %v653, 0.0
        %658 = vadd.xlane.f32.xlu0 %v657
        %v659 = vpop.xlane.xlu0 %658
        %v660 = vmul.f32 %v656, 0.015625
        %v661 = vmul.f32 %v659, 0.015625
        %v662 = vadd.f32 %v660, 1e-05
        %v663 = vadd.f32 %v661, 1e-05
        %v664 = vrsqrt.pop %v662
        %v665 = vmul.f32 %v664, %v662
        %v666 = vmul.f32 %v665, %v664
        %v667 = vmul.f32 0.5, %v666
        %v668 = vsub.f32 1.5, %v667
        %v669 = vmul.f32 %v664, %v668
        %vm670 = vweird.f32 %v662
        %vm671 = vweird.f32 %v664
        %vm672 = vmor %vm670, %vm671
        %v673 = vsel %vm672, %v664, %v669
        %v674 = vrsqrt.pop %v663
        %v675 = vmul.f32 %v674, %v663
        %v676 = vmul.f32 %v675, %v674
        %v677 = vmul.f32 0.5, %v676
        %v678 = vsub.f32 1.5, %v677
        %v679 = vmul.f32 %v674, %v678
        %vm680 = vweird.f32 %v663
        %vm681 = vweird.f32 %v674
        %vm682 = vmor %vm680, %vm681
        %v683 = vsel %vm682, %v674, %v679
        %v684 = vmul.f32 %v650, %v673
        %v685 = vmul.f32 %v651, %v683
        %v686 = vmul.f32 %v684, 0.01
        %v687 = vmul.f32 %v685, 0.01
        %v688 = vmax.f32 %v684, %v686
        %v689 = vmax.f32 %v685, %v687
        %v690 = vpack.c.bf16 %v688, %v688
        %v691 = vpack.c.bf16 %v689, %v689
        %vm692 = vcmask 519168
        %693 = vst.msk [vmem:[%s370] sm:$0xf] %vm692, %v690
        %694 = vst.msk [vmem:[%s370 + $0x4] sm:$0xf] %vm692, %v691
        %s695 = sand.u32 %s172, 1
        %s696 = scalar_lea.sflag [#allocation6], %s695
        %s697 = sand.u32 %s172, 1
        %s698 = smul.addr %s697, 8
        %s699 = scalar_lea.vmem [#allocation15], %s698
        // Predicated region
        $region69: #{tpu_custom_call.1} parent=43 // pred_check
          %p700 = pneg %p182
        $region70: #{tpu_custom_call.1} parent=43 // pred_check_branch
          %702 = sbr.rel (%p700) target = $region72
        $region71: #{tpu_custom_call.1} parent=43 // pred_region
          %704 = vsyncadd %s696, 0
          %s705 = smul.addr %s28, 2
          %s706 = smul.addr %s705, 4
          %s707 = scalar_lea.hbm %s6, %s706
          %s708 = sshll.u32 %s699, 4
          %s709 = int_to_ptr.vmem [resolvable:$true] %s708
          %s710 = sshll.u32 %s707, 4
          %s711 = int_to_ptr.hbm [resolvable:$true] %s710
          %716 = dma.vmem_to_hbm [thread:$0]  %s709, 128, %s711, %s696, 64, 64, 4
        $region72: #{tpu_custom_call.1} parent=43 // pred_fallthru
          _
      $region44: #{tpu_custom_call.1} parent=5 // pred_fallthru
        _
      %p717 = scmp.le.s32.totalorder 2, %s23
      // Predicated region
      $region73: #{tpu_custom_call.1} parent=5 // pred_check
        %p718 = pneg %p717
      $region74: #{tpu_custom_call.1} parent=5 // pred_check_branch
        %720 = sbr.rel (%p718) target = $region76
      $region75: #{tpu_custom_call.1} parent=5 // pred_region
        %s721 = ssub.s32 %s23, 2
        // Predicated region
        $region77: #{tpu_custom_call.1} parent=75 // pred_check
          %p722 = pneg %p188
        $region78: #{tpu_custom_call.1} parent=75 // pred_check_branch
          %724 = sbr.rel (%p722) target = $region80
        $region79: #{tpu_custom_call.1} parent=75 // pred_region
          %s725 = sand.u32 %s173, 1
          %s726 = scalar_lea.sflag [#allocation6], %s725
          %s727 = sand.u32 %s173, 1
          %s728 = smul.addr %s727, 8
          %s729 = scalar_lea.vmem [#allocation15], %s728
          %731 = dma.done %s726, 128
        $region80: #{tpu_custom_call.1} parent=75 // pred_fallthru
          _
      $region76: #{tpu_custom_call.1} parent=5 // pred_fallthru
        _
    $region6: #{tpu_custom_call.1} parent=1 // loop_footer
      %s27 = sadd.s32 1, %s23
    $region7: #{tpu_custom_call.1} parent=1 // loop_footer_branch
      %22 = sbr.rel target = $region3
    $region8: #{tpu_custom_call.1} parent=1 // loop_exit
      _
    %732 = vsyncpa [#allocation5], 1
    %s733 = scalar_lea.sflag [#allocation5], 1
    %734 = vsyncpa %s733, 1
    %735 = vsyncpa [#allocation8], 1
    %s736 = scalar_lea.sflag [#allocation8], 1
    %737 = vsyncpa %s736, 1
    %738 = vsyncpa [#allocation11], 1
    %739 = vsyncpa [#allocation14], 1
    %740 = vsyncpa [#allocation6], 1
    %s741 = scalar_lea.sflag [#allocation6], 1
    %742 = vsyncpa %s741, 1

</llo_original>
